<compile_context>
chip_gen: v7x
topology: tpu7x:2x2x1
jax: 0.10.0
libtpu: 0.0.40
codegen_flags: <defaults>
</compile_context>

<pallas_src>
import jax
import jax.numpy as jnp
from jax import lax
from jax.experimental import pallas as pl
from jax.experimental.pallas import tpu as pltpu


def _round_up(x, m):
    return (x + m - 1) // m * m


def _log_sigmoid(x):
    # numerically stable log(sigmoid(x)) = min(x, 0) - log(1 + exp(-|x|))
    return jnp.minimum(x, 0.0) - jnp.log(1.0 + jnp.exp(-jnp.abs(x)))


def _make_kernel(*, TB, K, V_pad, B_true):
    """Kernel closure for static tile size / negatives / padded vocab / true batch."""

    def kernel(cidx_ref, pidx_ref, nidx_ref,      # (TB,1), (TB,1), (K*TB,1) int32
               in_tab_ref, out_tab_ref,           # (V_pad, D_pad) f32, VMEM-resident
               out_ref):                          # (8, 128) f32 accumulator block
        t = pl.program_id(0)

        @pl.when(t == 0)
        def _():
            out_ref[...] = jnp.zeros(out_ref.shape, out_ref.dtype)

        vocab_iota = lax.broadcasted_iota(jnp.int32, (TB, V_pad), 1)

        # ---- center-row gather as a one-hot MXU matmul (no DMAs, no loops) ----
        cidx = cidx_ref[...]                                           # (TB, 1)
        oh_c = (cidx == vocab_iota).astype(jnp.float32)                # (TB, V_pad)
        c = jnp.dot(oh_c, in_tab_ref[...],
                    preferred_element_type=jnp.float32)                # (TB, D_pad)

        # ---- scores of every center row against the whole out-embedding table
        s = lax.dot_general(c, out_tab_ref[...],
                            dimension_numbers=(((1,), (1,)), ((), ())),
                            preferred_element_type=jnp.float32)        # (TB, V_pad)

        # ---- positive term: select column pos_idx[b] from row b ----
        pidx = pidx_ref[...]                                           # (TB, 1)
        pos_score = jnp.sum(jnp.where(pidx == vocab_iota, s, 0.0),
                            axis=-1, keepdims=True)                    # (TB, 1)
        per_ex = _log_sigmoid(pos_score)

        # ---- K negative terms (k-major index layout, static slices) ----
        for k in range(K):                                             # static unroll
            nk = nidx_ref[pl.ds(k * TB, TB), :]                        # (TB, 1)
            neg_score = jnp.sum(jnp.where(nk == vocab_iota, s, 0.0),
                                axis=-1, keepdims=True)
            per_ex = per_ex + _log_sigmoid(-neg_score)

        # ---- mask padded tail rows, accumulate tile sum into one element ----
        row = t * TB + lax.broadcasted_iota(jnp.int32, (TB, 1), 0)
        per_ex = jnp.where(row < B_true, per_ex, 0.0)
        out_ref[0:1, 0:1] += jnp.sum(per_ex, axis=0, keepdims=True)

    return kernel


def skipgram_neg_sampling_loss(in_embed, out_embed, center_words,
                               pos_context_words, neg_context_words,
                               *, max_tile_rows=512):
    V, D = in_embed.shape
    B = int(center_words.shape[0])
    K = int(neg_context_words.shape[1])

    # Lane-dense layout: pad D to a multiple of 128 (zero columns do not change
    # any dot product) and V to a multiple of 8 (padded rows are never selected).
    D_pad = _round_up(D, 128)
    V_pad = _round_up(max(V, 8), 8)
    in_tab = jnp.zeros((V_pad, D_pad), jnp.float32).at[:V, :D].set(
        in_embed.astype(jnp.float32))
    out_tab = jnp.zeros((V_pad, D_pad), jnp.float32).at[:V, :D].set(
        out_embed.astype(jnp.float32))

    # Batch tile size: bound the (TB, V_pad) f32 intermediates (one-hot, score
    # matrix, select masks) to a modest VMEM budget (v7x has only 64 MiB VMEM).
    budget = 12 * 1024 * 1024
    bytes_per_row = (4 * V_pad + 2 * D_pad) * 4
    tb_cap = max(8, (budget // bytes_per_row) // 8 * 8)
    TB = int(min(max_tile_rows, tb_cap, _round_up(B, 8)))
    nt = -(-B // TB)
    B_pad = nt * TB
    pad = B_pad - B

    # Indices as lane-1 column vectors (broadcast against the vocab iota in the
    # kernel); clamp so padded / out-of-range ids stay in-table.
    cidx = jnp.pad(jnp.clip(center_words.astype(jnp.int32), 0, V - 1), (0, pad))
    pidx = jnp.pad(jnp.clip(pos_context_words.astype(jnp.int32), 0, V - 1), (0, pad))
    nidx = jnp.pad(jnp.clip(neg_context_words.astype(jnp.int32), 0, V - 1),
                   ((0, pad), (0, 0)))
    cidx = cidx.reshape(B_pad, 1)
    pidx = pidx.reshape(B_pad, 1)
    # k-major within each tile: row k*TB + b of tile t holds neg id of (t*TB+b, k).
    nidx = nidx.reshape(nt, TB, K).transpose(0, 2, 1).reshape(nt * K * TB, 1)

    kernel = _make_kernel(TB=TB, K=K, V_pad=V_pad, B_true=B)

    table_bytes = 2 * 2 * V_pad * D_pad * 4          # 2 tables, double-buffered
    vmem_limit = int(min(48 << 20, max(16 << 20, table_bytes + budget + (4 << 20))))

    partial = pl.pallas_call(
        kernel,
        out_shape=jax.ShapeDtypeStruct((8, 128), jnp.float32),
        grid=(nt,),
        in_specs=[
            pl.BlockSpec((TB, 1), lambda t: (t, 0)),            # center ids
            pl.BlockSpec((TB, 1), lambda t: (t, 0)),            # pos ids
            pl.BlockSpec((K * TB, 1), lambda t: (t, 0)),        # neg ids (k-major)
            pl.BlockSpec((V_pad, D_pad), lambda t: (0, 0)),     # in_embed  (resident)
            pl.BlockSpec((V_pad, D_pad), lambda t: (0, 0)),     # out_embed (resident)
        ],
        out_specs=pl.BlockSpec((8, 128), lambda t: (0, 0)),
        compiler_params=pltpu.CompilerParams(
            dimension_semantics=("arbitrary",),
            vmem_limit_bytes=vmem_limit),
    )(cidx, pidx, nidx, in_tab, out_tab)

    # Only element [0, 0] is meaningful; divide by the TRUE batch size.
    return -(partial[0, 0] / B)


def reference_loss(in_embed, out_embed, center_words, pos_context_words,
                   neg_context_words):
    """Pure-JAX mirror of the PyTorch forward, for verification."""
    c = in_embed[center_words]
    p = out_embed[pos_context_words]
    n = out_embed[neg_context_words]
    pos_score = jnp.sum(c * p, axis=1)
    pos_loss = jax.nn.log_sigmoid(pos_score)
    neg_score = jnp.einsum('bkd,bd->bk', -n, c)
    neg_loss = jax.nn.log_sigmoid(neg_score).sum(axis=1)
    return -(pos_loss + neg_loss).mean()


if __name__ == "__main__":
    vocab_size = 64
    embed_dim = 32
    batch = 10        # deliberately not a multiple of 8 to exercise tail masking
    num_neg = 4       # negatives per (center, pos) pair

    key = jax.random.PRNGKey(0)
    k_in, k_out, k_c, k_p, k_n = jax.random.split(key, 5)

    in_embed = jax.random.normal(k_in, (vocab_size, embed_dim), dtype=jnp.float32)
    out_embed = jax.random.normal(k_out, (vocab_size, embed_dim), dtype=jnp.float32)

    center_words = jax.random.randint(k_c, (batch,), 0, vocab_size, dtype=jnp.int32)
    pos_context_words = jax.random.randint(k_p, (batch,), 0, vocab_size,
                                           dtype=jnp.int32)
    neg_context_words = jax.random.randint(k_n, (batch, num_neg), 0, vocab_size,
                                           dtype=jnp.int32)

    loss = skipgram_neg_sampling_loss(in_embed, out_embed, center_words,
                                      pos_context_words, neg_context_words)
    loss = jax.block_until_ready(loss)

    ref = reference_loss(in_embed, out_embed, center_words, pos_context_words,
                         neg_context_words)
    assert jnp.allclose(loss, ref, rtol=1e-5, atol=1e-5), (loss, ref)

    print("KERNEL_OK")
</pallas_src>

<mosaic_0001>
module attributes {stable_mosaic.version = 11 : i64} {
  func.func @kernel(%arg0: i32, %arg1: memref<16x1xi32, #tpu.memory_space<vmem>>, %arg2: memref<16x1xi32, #tpu.memory_space<vmem>>, %arg3: memref<64x1xi32, #tpu.memory_space<vmem>>, %arg4: memref<64x128xf32, #tpu.memory_space<vmem>>, %arg5: memref<64x128xf32, #tpu.memory_space<vmem>>, %arg6: memref<8x128xf32, #tpu.memory_space<vmem>>) attributes {dimension_semantics = [#tpu.dimension_semantics<arbitrary>], iteration_bounds = array<i64: 1>, scalar_prefetch = 0 : i64, scratch_operands = 0 : i64, tpu.core_type = #tpu.core_type<tc>, window_params = [{transform_indices = @transform_0, window_bounds = array<i64: 16, 1>}, {transform_indices = @transform_1, window_bounds = array<i64: 16, 1>}, {transform_indices = @transform_2, window_bounds = array<i64: 64, 1>}, {pipeline_mode = #tpu.pipeline_mode<synchronous>, transform_indices = @transform_3, window_bounds = array<i64: 64, 128>}, {pipeline_mode = #tpu.pipeline_mode<synchronous>, transform_indices = @transform_4, window_bounds = array<i64: 64, 128>}, {pipeline_mode = #tpu.pipeline_mode<synchronous>, transform_indices = @transform_5, window_bounds = array<i64: 8, 128>}]} {
    %c0_i32 = arith.constant 0 : i32
    %0 = arith.cmpi eq, %arg0, %c0_i32 : i32
    %1 = arith.extui %0 : i1 to i32
    %c0_i32_0 = arith.constant 0 : i32
    %2 = arith.cmpi ne, %1, %c0_i32_0 : i32
    scf.if %2 {
      %cst_49 = arith.constant 0.000000e+00 : f32
      %123 = vector.broadcast %cst_49 : f32 to vector<8x128xf32>
      %c0_50 = arith.constant 0 : index
      %c0_51 = arith.constant 0 : index
      %124 = vector.load %arg6[%c0_50, %c0_51] : memref<8x128xf32, #tpu.memory_space<vmem>>, vector<8x128xf32>
      tpu.vector_store %arg6[%c0_50, %c0_51], %123 {strides = array<i32>} : memref<8x128xf32, #tpu.memory_space<vmem>>, vector<8x128xf32>,
    } else {
    }
    %3 = tpu.iota {dimensions = array<i32: 1>} : vector<16x64xi32>
    %c0 = arith.constant 0 : index
    %c0_1 = arith.constant 0 : index
    %4 = vector.load %arg1[%c0, %c0_1] : memref<16x1xi32, #tpu.memory_space<vmem>>, vector<16x1xi32>
    %5 = vector.broadcast %4 : vector<16x1xi32> to vector<16x64xi32>
    %6 = arith.cmpi eq, %5, %3 : vector<16x64xi32>
    %7 = arith.extui %6 : vector<16x64xi1> to vector<16x64xi32>
    %8 = arith.sitofp %7 : vector<16x64xi32> to vector<16x64xf32>
    %c0_2 = arith.constant 0 : index
    %c0_3 = arith.constant 0 : index
    %9 = vector.load %arg4[%c0_2, %c0_3] : memref<64x128xf32, #tpu.memory_space<vmem>>, vector<64x128xf32>
    %cst = arith.constant dense<0.000000e+00> : vector<16x128xf32>
    %10 = tpu.matmul %8, %9, %cst {dimension_numbers = #tpu.dot_dimension_numbers<[1], [0], [0], [1], [0, 0, 1, 1], [], []>} : vector<16x64xf32>, vector<64x128xf32>, vector<16x128xf32> -> vector<16x128xf32>
    %c0_4 = arith.constant 0 : index
    %c0_5 = arith.constant 0 : index
    %11 = vector.load %arg5[%c0_4, %c0_5] : memref<64x128xf32, #tpu.memory_space<vmem>>, vector<64x128xf32>
    %cst_6 = arith.constant dense<0.000000e+00> : vector<16x64xf32>
    %12 = tpu.matmul %10, %11, %cst_6 {dimension_numbers = #tpu.dot_dimension_numbers<[1], [1], [0], [0], [0, 0, 1, 0], [], []>} : vector<16x128xf32>, vector<64x128xf32>, vector<16x64xf32> -> vector<16x64xf32>
    %c0_7 = arith.constant 0 : index
    %c0_8 = arith.constant 0 : index
    %13 = vector.load %arg2[%c0_7, %c0_8] : memref<16x1xi32, #tpu.memory_space<vmem>>, vector<16x1xi32>
    %14 = vector.broadcast %13 : vector<16x1xi32> to vector<16x64xi32>
    %15 = arith.cmpi eq, %14, %3 : vector<16x64xi32>
    %cst_9 = arith.constant 0.000000e+00 : f32
    %16 = vector.broadcast %cst_9 : f32 to vector<16x64xf32>
    %17 = arith.select %15, %12, %16 : vector<16x64xi1>, vector<16x64xf32>
    %cst_10 = arith.constant dense<0.000000e+00> : vector<16xf32>
    %18 = vector.multi_reduction <add>, %17, %cst_10 [1] : vector<16x64xf32> to vector<16xf32>
    %19 = vector.shape_cast %18 : vector<16xf32> to vector<16x1xf32>
    %cst_11 = arith.constant 0.000000e+00 : f32
    %20 = vector.broadcast %cst_11 : f32 to vector<16x1xf32>
    %21 = arith.minimumf %19, %20 : vector<16x1xf32>
    %22 = math.absf %19 : vector<16x1xf32>
    %cst_12 = arith.constant 0.000000e+00 : f32
    %23 = vector.broadcast %cst_12 : f32 to vector<16x1xf32>
    %24 = arith.subf %23, %22 : vector<16x1xf32>
    %25 = math.exp %24 : vector<16x1xf32>
    %cst_13 = arith.constant 1.000000e+00 : f32
    %26 = vector.broadcast %cst_13 : f32 to vector<16x1xf32>
    %27 = arith.addf %26, %25 : vector<16x1xf32>
    %28 = math.log %27 : vector<16x1xf32>
    %29 = arith.subf %21, %28 : vector<16x1xf32>
    %c0_14 = arith.constant 0 : index
    %c0_15 = arith.constant 0 : index
    %30 = vector.load %arg3[%c0_14, %c0_15] : memref<64x1xi32, #tpu.memory_space<vmem>>, vector<16x1xi32>
    %31 = vector.broadcast %30 : vector<16x1xi32> to vector<16x64xi32>
    %32 = arith.cmpi eq, %31, %3 : vector<16x64xi32>
    %cst_16 = arith.constant 0.000000e+00 : f32
    %33 = vector.broadcast %cst_16 : f32 to vector<16x64xf32>
    %34 = arith.select %32, %12, %33 : vector<16x64xi1>, vector<16x64xf32>
    %cst_17 = arith.constant dense<0.000000e+00> : vector<16xf32>
    %35 = vector.multi_reduction <add>, %34, %cst_17 [1] : vector<16x64xf32> to vector<16xf32>
    %36 = vector.shape_cast %35 : vector<16xf32> to vector<16x1xf32>
    %cst_18 = arith.constant 0.000000e+00 : f32
    %37 = vector.broadcast %cst_18 : f32 to vector<16x1xf32>
    %38 = arith.subf %37, %36 : vector<16x1xf32>
    %cst_19 = arith.constant 0.000000e+00 : f32
    %39 = vector.broadcast %cst_19 : f32 to vector<16x1xf32>
    %40 = arith.minimumf %38, %39 : vector<16x1xf32>
    %41 = math.absf %38 : vector<16x1xf32>
    %cst_20 = arith.constant 0.000000e+00 : f32
    %42 = vector.broadcast %cst_20 : f32 to vector<16x1xf32>
    %43 = arith.subf %42, %41 : vector<16x1xf32>
    %44 = math.exp %43 : vector<16x1xf32>
    %cst_21 = arith.constant 1.000000e+00 : f32
    %45 = vector.broadcast %cst_21 : f32 to vector<16x1xf32>
    %46 = arith.addf %45, %44 : vector<16x1xf32>
    %47 = math.log %46 : vector<16x1xf32>
    %48 = arith.subf %40, %47 : vector<16x1xf32>
    %49 = arith.addf %29, %48 : vector<16x1xf32>
    %c16 = arith.constant 16 : index
    %c0_22 = arith.constant 0 : index
    %50 = vector.load %arg3[%c16, %c0_22] : memref<64x1xi32, #tpu.memory_space<vmem>>, vector<16x1xi32>
    %51 = vector.broadcast %50 : vector<16x1xi32> to vector<16x64xi32>
    %52 = arith.cmpi eq, %51, %3 : vector<16x64xi32>
    %cst_23 = arith.constant 0.000000e+00 : f32
    %53 = vector.broadcast %cst_23 : f32 to vector<16x64xf32>
    %54 = arith.select %52, %12, %53 : vector<16x64xi1>, vector<16x64xf32>
    %cst_24 = arith.constant dense<0.000000e+00> : vector<16xf32>
    %55 = vector.multi_reduction <add>, %54, %cst_24 [1] : vector<16x64xf32> to vector<16xf32>
    %56 = vector.shape_cast %55 : vector<16xf32> to vector<16x1xf32>
    %cst_25 = arith.constant 0.000000e+00 : f32
    %57 = vector.broadcast %cst_25 : f32 to vector<16x1xf32>
    %58 = arith.subf %57, %56 : vector<16x1xf32>
    %cst_26 = arith.constant 0.000000e+00 : f32
    %59 = vector.broadcast %cst_26 : f32 to vector<16x1xf32>
    %60 = arith.minimumf %58, %59 : vector<16x1xf32>
    %61 = math.absf %58 : vector<16x1xf32>
    %cst_27 = arith.constant 0.000000e+00 : f32
    %62 = vector.broadcast %cst_27 : f32 to vector<16x1xf32>
    %63 = arith.subf %62, %61 : vector<16x1xf32>
    %64 = math.exp %63 : vector<16x1xf32>
    %cst_28 = arith.constant 1.000000e+00 : f32
    %65 = vector.broadcast %cst_28 : f32 to vector<16x1xf32>
    %66 = arith.addf %65, %64 : vector<16x1xf32>
    %67 = math.log %66 : vector<16x1xf32>
    %68 = arith.subf %60, %67 : vector<16x1xf32>
    %69 = arith.addf %49, %68 : vector<16x1xf32>
    %c32 = arith.constant 32 : index
    %c0_29 = arith.constant 0 : index
    %70 = vector.load %arg3[%c32, %c0_29] : memref<64x1xi32, #tpu.memory_space<vmem>>, vector<16x1xi32>
    %71 = vector.broadcast %70 : vector<16x1xi32> to vector<16x64xi32>
    %72 = arith.cmpi eq, %71, %3 : vector<16x64xi32>
    %cst_30 = arith.constant 0.000000e+00 : f32
    %73 = vector.broadcast %cst_30 : f32 to vector<16x64xf32>
    %74 = arith.select %72, %12, %73 : vector<16x64xi1>, vector<16x64xf32>
    %cst_31 = arith.constant dense<0.000000e+00> : vector<16xf32>
    %75 = vector.multi_reduction <add>, %74, %cst_31 [1] : vector<16x64xf32> to vector<16xf32>
    %76 = vector.shape_cast %75 : vector<16xf32> to vector<16x1xf32>
    %cst_32 = arith.constant 0.000000e+00 : f32
    %77 = vector.broadcast %cst_32 : f32 to vector<16x1xf32>
    %78 = arith.subf %77, %76 : vector<16x1xf32>
    %cst_33 = arith.constant 0.000000e+00 : f32
    %79 = vector.broadcast %cst_33 : f32 to vector<16x1xf32>
    %80 = arith.minimumf %78, %79 : vector<16x1xf32>
    %81 = math.absf %78 : vector<16x1xf32>
    %cst_34 = arith.constant 0.000000e+00 : f32
    %82 = vector.broadcast %cst_34 : f32 to vector<16x1xf32>
    %83 = arith.subf %82, %81 : vector<16x1xf32>
    %84 = math.exp %83 : vector<16x1xf32>
    %cst_35 = arith.constant 1.000000e+00 : f32
    %85 = vector.broadcast %cst_35 : f32 to vector<16x1xf32>
    %86 = arith.addf %85, %84 : vector<16x1xf32>
    %87 = math.log %86 : vector<16x1xf32>
    %88 = arith.subf %80, %87 : vector<16x1xf32>
    %89 = arith.addf %69, %88 : vector<16x1xf32>
    %c48 = arith.constant 48 : index
    %c0_36 = arith.constant 0 : index
    %90 = vector.load %arg3[%c48, %c0_36] : memref<64x1xi32, #tpu.memory_space<vmem>>, vector<16x1xi32>
    %91 = vector.broadcast %90 : vector<16x1xi32> to vector<16x64xi32>
    %92 = arith.cmpi eq, %91, %3 : vector<16x64xi32>
    %cst_37 = arith.constant 0.000000e+00 : f32
    %93 = vector.broadcast %cst_37 : f32 to vector<16x64xf32>
    %94 = arith.select %92, %12, %93 : vector<16x64xi1>, vector<16x64xf32>
    %cst_38 = arith.constant dense<0.000000e+00> : vector<16xf32>
    %95 = vector.multi_reduction <add>, %94, %cst_38 [1] : vector<16x64xf32> to vector<16xf32>
    %96 = vector.shape_cast %95 : vector<16xf32> to vector<16x1xf32>
    %cst_39 = arith.constant 0.000000e+00 : f32
    %97 = vector.broadcast %cst_39 : f32 to vector<16x1xf32>
    %98 = arith.subf %97, %96 : vector<16x1xf32>
    %cst_40 = arith.constant 0.000000e+00 : f32
    %99 = vector.broadcast %cst_40 : f32 to vector<16x1xf32>
    %100 = arith.minimumf %98, %99 : vector<16x1xf32>
    %101 = math.absf %98 : vector<16x1xf32>
    %cst_41 = arith.constant 0.000000e+00 : f32
    %102 = vector.broadcast %cst_41 : f32 to vector<16x1xf32>
    %103 = arith.subf %102, %101 : vector<16x1xf32>
    %104 = math.exp %103 : vector<16x1xf32>
    %cst_42 = arith.constant 1.000000e+00 : f32
    %105 = vector.broadcast %cst_42 : f32 to vector<16x1xf32>
    %106 = arith.addf %105, %104 : vector<16x1xf32>
    %107 = math.log %106 : vector<16x1xf32>
    %108 = arith.subf %100, %107 : vector<16x1xf32>
    %109 = arith.addf %89, %108 : vector<16x1xf32>
    %c16_i32 = arith.constant 16 : i32
    %110 = arith.muli %arg0, %c16_i32 : i32
    %111 = tpu.iota {dimensions = array<i32: 0>} : vector<16x1xi32>
    %112 = vector.broadcast %110 : i32 to vector<16x1xi32>
    %113 = arith.addi %112, %111 : vector<16x1xi32>
    %c10_i32 = arith.constant 10 : i32
    %114 = vector.broadcast %c10_i32 : i32 to vector<16x1xi32>
    %115 = arith.cmpi slt, %113, %114 : vector<16x1xi32>
    %cst_43 = arith.constant 0.000000e+00 : f32
    %116 = vector.broadcast %cst_43 : f32 to vector<16x1xf32>
    %117 = arith.select %115, %109, %116 : vector<16x1xi1>, vector<16x1xf32>
    %c0_44 = arith.constant 0 : index
    %c0_45 = arith.constant 0 : index
    %118 = vector.load %arg6[%c0_44, %c0_45] : memref<8x128xf32, #tpu.memory_space<vmem>>, vector<1x1xf32>
    %cst_46 = arith.constant dense<0.000000e+00> : vector<1xf32>
    %119 = vector.multi_reduction <add>, %117, %cst_46 [0] : vector<16x1xf32> to vector<1xf32>
    %120 = vector.shape_cast %119 : vector<1xf32> to vector<1x1xf32>
    %121 = arith.addf %118, %120 : vector<1x1xf32>
    %c0_47 = arith.constant 0 : index
    %c0_48 = arith.constant 0 : index
    %122 = vector.load %arg6[%c0_47, %c0_48] : memref<8x128xf32, #tpu.memory_space<vmem>>, vector<1x1xf32>
    tpu.vector_store %arg6[%c0_47, %c0_48], %121 {strides = array<i32>} : memref<8x128xf32, #tpu.memory_space<vmem>>, vector<1x1xf32>,
    return
  }
  func.func @transform_0(%arg0: i32) -> (i32, i32) {
    %c0_i32 = arith.constant 0 : i32
    %c0_i32_0 = arith.constant 0 : i32
    return %arg0, %c0_i32 : i32, i32
  }
  func.func @transform_1(%arg0: i32) -> (i32, i32) {
    %c0_i32 = arith.constant 0 : i32
    %c0_i32_0 = arith.constant 0 : i32
    return %arg0, %c0_i32 : i32, i32
  }
  func.func @transform_2(%arg0: i32) -> (i32, i32) {
    %c0_i32 = arith.constant 0 : i32
    %c0_i32_0 = arith.constant 0 : i32
    return %arg0, %c0_i32 : i32, i32
  }
  func.func @transform_3(%arg0: i32) -> (i32, i32) {
    %c0_i32 = arith.constant 0 : i32
    %c0_i32_0 = arith.constant 0 : i32
    %c0_i32_1 = arith.constant 0 : i32
    return %c0_i32, %c0_i32_0 : i32, i32
  }
  func.func @transform_4(%arg0: i32) -> (i32, i32) {
    %c0_i32 = arith.constant 0 : i32
    %c0_i32_0 = arith.constant 0 : i32
    %c0_i32_1 = arith.constant 0 : i32
    return %c0_i32, %c0_i32_0 : i32, i32
  }
  func.func @transform_5(%arg0: i32) -> (i32, i32) {
    %c0_i32 = arith.constant 0 : i32
    %c0_i32_0 = arith.constant 0 : i32
    %c0_i32_1 = arith.constant 0 : i32
    return %c0_i32, %c0_i32_0 : i32, i32
  }
}

</mosaic_0001>

<llo_original>
// kernel: tpu_custom_call.1
$region0: #{tpu_custom_call.1}
  #allocation0 [shape = 'u32[]', space=smem, size = 0x4, offset = 0x4, fixed_abs, tag = 'smem constant byte address 0x4 - core index']
  #allocation1 [shape = 'u32[144,128]{1,0:T(1,128)}', space=vmem, size = 0x12000, scoped, tag = 'internal scratch']
  %s0 = inlined_call_operand.vmem [shape: s32[16,1], index: 0, kind: input, shape index: {}]
  %s1 = inlined_call_operand.vmem [shape: s32[16,1], index: 1, kind: input, shape index: {}]
  %s2 = inlined_call_operand.vmem [shape: s32[64,1], index: 2, kind: input, shape index: {}]
  %s3 = inlined_call_operand.vmem [shape: f32[64,128], index: 3, kind: input, shape index: {}]
  %s4 = inlined_call_operand.hbm [shape: f32[64,128], index: 4, kind: input, shape index: {}]
  %s5 = inlined_call_operand.hbm [shape: f32[8,128], index: 5, kind: output, shape index: {}]
  %s6 = sld [smem:[#allocation0]]
  $region38: #{tpu_custom_call.1} parent=0
    _
  %s8 = ssub.s32 1, %s6
  %s9 = scalar_select 0, %s8, %s6
  $region1: #{tpu_custom_call.1} parent=0
    #allocation2 [shape = 'u8[32768]{0}', space=vmem, size = 0x8000, scoped, tag = 'input window, operand 4, single buffered']
    #allocation3 [shape = 's32[1]{0}', space=sflag, size = 0x4, scoped, tag = 'scoped memory for tpu_custom_call.1']
    #allocation4 [shape = 's32[1]{0}', space=sflag, size = 0x4, scoped, tag = 'scoped memory for tpu_custom_call.1']
    #allocation5 [shape = 'u8[4096]{0}', space=vmem, size = 0x1000, scoped, tag = 'output window, operand 0, single buffered']
    %10 = vsyncpa [#allocation3], 0
    %11 = vsyncpa [#allocation4], 0
    // Predicated region
    $region2: #{tpu_custom_call.1} parent=1 // pred_check
      _
    $region3: #{tpu_custom_call.1} parent=1 // pred_check_branch
      %13 = sbr.rel (0) target = $region5
    $region4: #{tpu_custom_call.1} parent=1 // pred_region
      _
    $region5: #{tpu_custom_call.1} parent=1 // pred_fallthru
      _
    // Predicated region
    $region6: #{tpu_custom_call.1} parent=1 // pred_check
      _
    $region7: #{tpu_custom_call.1} parent=1 // pred_check_branch
      %15 = sbr.rel (0) target = $region9
    $region8: #{tpu_custom_call.1} parent=1 // pred_region
      _
    $region9: #{tpu_custom_call.1} parent=1 // pred_fallthru
      _
    // Predicated region
    $region10: #{tpu_custom_call.1} parent=1 // pred_check
      _
    $region11: #{tpu_custom_call.1} parent=1 // pred_check_branch
      %17 = sbr.rel (0) target = $region13
    $region12: #{tpu_custom_call.1} parent=1 // pred_region
      _
    $region13: #{tpu_custom_call.1} parent=1 // pred_fallthru
      _
    // Predicated region
    $region14: #{tpu_custom_call.1} parent=1 // pred_check
      _
    $region15: #{tpu_custom_call.1} parent=1 // pred_check_branch
      %19 = sbr.rel (0) target = $region17
    $region16: #{tpu_custom_call.1} parent=1 // pred_region
      _
    $region17: #{tpu_custom_call.1} parent=1 // pred_fallthru
      _
    // Predicated region
    $region18: #{tpu_custom_call.1} parent=1 // pred_check
      _
    $region19: #{tpu_custom_call.1} parent=1 // pred_check_branch
      %21 = sbr.rel (0) target = $region21
    $region20: #{tpu_custom_call.1} parent=1 // pred_region
      %s23 = ssub.s32 1024, 1024
      %24 = vsyncadd [#allocation3], %s23
      %s25 = sshll.u32 [#allocation2], 4
      %s26 = int_to_ptr.vmem [resolvable:$true] %s25
      %31 = dma.hbm_to_vmem [thread:$0]  %s4, 1024, %s26, [#allocation3], 128, 128, 8
    $region21: #{tpu_custom_call.1} parent=1 // pred_fallthru
      _
    // Predicated region
    $region22: #{tpu_custom_call.1} parent=1 // pred_check
      _
    $region23: #{tpu_custom_call.1} parent=1 // pred_check_branch
      %33 = sbr.rel (0) target = $region25
    $region24: #{tpu_custom_call.1} parent=1 // pred_region
      %34 = dma.done [#allocation3], 1024
    $region25: #{tpu_custom_call.1} parent=1 // pred_fallthru
      _
    %p35 = scmp.eq.s32.totalorder 0, 0
    // Predicated region
    $region26: #{tpu_custom_call.1} parent=1 // pred_check
      %p36 = pneg %p35
    $region27: #{tpu_custom_call.1} parent=1 // pred_check_branch
      %38 = sbr.rel (%p36) target = $region29
    $region28: #{tpu_custom_call.1} parent=1 // pred_region
      %39 = vst [vmem:[#allocation5] sm:$0xff] 0.0
    $region29: #{tpu_custom_call.1} parent=1 // pred_fallthru
      _
    %v40 = vlaneseq
    %v41 = vand.u32 %v40, 127
    %v42 = vld [vmem:[%s0] sm:$0xff]
    %v43 = vld [vmem:[%s0 + $0x8] sm:$0xff]
    %44 = vset.pattern.permute.xlu0 0
    %45 = vperm.xlu0 %44, %v42
    %v46 = vpop.permute.xlu0 %45
    %47 = vset.pattern.permute.xlu0 0
    %48 = vperm.xlu0 %47, %v43
    %v49 = vpop.permute.xlu0 %48
    %vm50 = vcmp.eq.s32.totalorder %v46, %v41
    %vm51 = vcmp.eq.s32.totalorder %v49, %v41
    %v52 = vsel %vm50, 1, 0
    %v53 = vsel %vm51, 1, 0
    %v54 = vcvt.s32.f32 %v52
    %v55 = vcvt.s32.f32 %v53
    %v56 = vld [vmem:[%s3] sm:$0xff]
    %v57 = vld [vmem:[%s3 + $0x8] sm:$0xff]
    %v58 = vld [vmem:[%s3 + $0x10] sm:$0xff]
    %v59 = vld [vmem:[%s3 + $0x18] sm:$0xff]
    %v60 = vld [vmem:[%s3 + $0x20] sm:$0xff]
    %v61 = vld [vmem:[%s3 + $0x28] sm:$0xff]
    %v62 = vld [vmem:[%s3 + $0x30] sm:$0xff]
    %v63 = vld [vmem:[%s3 + $0x38] sm:$0xff]
    %vm64 = vcmask 523264
    %v66 = vsel %vm64, %v54, 0
    %v69 = vsel %vm64, %v55, 0
    %71 = vmatprep.subr.mxu0 0.0
    %72 = vmatpush1.msra.mxu0 %v56
    %73 = vmatprep.subr.mxu0 0.0
    %74 = vmatpush1.msra.mxu0 %v57
    %75 = vmatprep.subr.mxu0 0.0
    %76 = vmatpush1.msra.mxu0 %v58
    %77 = vmatprep.subr.mxu0 0.0
    %78 = vmatpush1.msra.mxu0 %v59
    %79 = vmatprep.subr.mxu0 0.0
    %80 = vmatpush1.msra.mxu0 %v60
    %81 = vmatprep.subr.mxu0 0.0
    %82 = vmatpush1.msra.mxu0 %v61
    %83 = vmatprep.subr.mxu0 0.0
    %84 = vmatpush1.msra.mxu0 %v62
    %85 = vmatprep.subr.mxu0 0.0
    %86 = vmatpush1.msra.mxu0 %v63
    %87 = vmatprep.subr.mxu0 0.0
    %88 = vmatpush1.msra.mxu0 0.0
    %89 = vmatprep.subr.mxu0 0.0
    %90 = vmatpush1.msra.mxu0 0.0
    %91 = vmatprep.subr.mxu0 0.0
    %92 = vmatpush1.msra.mxu0 0.0
    %93 = vmatprep.subr.mxu0 0.0
    %94 = vmatpush1.msra.mxu0 0.0
    %95 = vmatprep.subr.mxu0 0.0
    %96 = vmatpush1.msra.mxu0 0.0
    %97 = vmatprep.subr.mxu0 0.0
    %98 = vmatpush1.msra.mxu0 0.0
    %99 = vmatprep.subr.mxu0 0.0
    %100 = vmatpush1.msra.mxu0 0.0
    %101 = vmatprep.subr.mxu0 0.0
    %102 = vmatpush1.msra.mxu0 0.0
    %103 = vmatprep.subr.mxu0 0.0
    %104 = vmatpush1.msra.mxu0 0.0
    %105 = vmatprep.subr.mxu0 0.0
    %106 = vmatpush1.msra.mxu0 0.0
    %107 = vmatprep.subr.mxu0 0.0
    %108 = vmatpush1.msra.mxu0 0.0
    %109 = vmatprep.subr.mxu0 0.0
    %110 = vmatpush1.msra.mxu0 0.0
    %111 = vmatprep.subr.mxu0 0.0
    %112 = vmatpush1.msra.mxu0 0.0
    %113 = vmatprep.subr.mxu0 0.0
    %114 = vmatpush1.msra.mxu0 0.0
    %115 = vmatprep.subr.mxu0 0.0
    %116 = vmatpush1.msra.mxu0 0.0
    %117 = vmatprep.subr.mxu0 0.0
    %118 = vmatpush1.msra.mxu0 0.0
    %119 = vmatprep.subr.mxu0 0.0
    %120 = vmatpush1.msra.mxu0 0.0
    %121 = vmatprep.subr.mxu0 0.0
    %122 = vmatpush1.msra.mxu0 0.0
    %123 = vmatprep.subr.mxu0 0.0
    %124 = vmatpush1.msra.mxu0 0.0
    %125 = vmatprep.subr.mxu0 0.0
    %126 = vmatpush1.msra.mxu0 0.0
    %127 = vmatprep.subr.mxu0 0.0
    %128 = vmatpush1.msra.mxu0 0.0
    %129 = vmatprep.subr.mxu0 0.0
    %130 = vmatpush1.msra.mxu0 0.0
    %131 = vmatprep.subr.mxu0 0.0
    %132 = vmatpush1.msra.mxu0 0.0
    %133 = vmatprep.subr.mxu0 0.0
    %134 = vmatpush1.msra.mxu0 0.0
    %135 = vmatprep.mubr.f32.mxu0 0.0
    %136 = vmatmul.mubr.f32.gmra.mrb[0].mxu0 %v66
    %v137 = vpop.f32.mrb[0].mxu0
    %v138 = vadd.f32 0.0, %v137
    %v139 = vpop.f32.mrb[0].mxu0
    %140 = vmatprep.mubr.f32.mxu0 0.0
    %141 = vmatmul.mubr.f32.gmra.mrb[0].mxu0 %v69
    %v142 = vpop.f32.mrb[0].mxu0
    %v143 = vadd.f32 0.0, %v142
    %v144 = vpop.f32.mrb[0].mxu0
    %145 = vdwg.mxu0
    %v146 = vld [vmem:[#allocation2] sm:$0xff]
    %v147 = vld [vmem:[#allocation2 + $0x8] sm:$0xff]
    %v148 = vld [vmem:[#allocation2 + $0x10] sm:$0xff]
    %v149 = vld [vmem:[#allocation2 + $0x18] sm:$0xff]
    %v150 = vld [vmem:[#allocation2 + $0x20] sm:$0xff]
    %v151 = vld [vmem:[#allocation2 + $0x28] sm:$0xff]
    %v152 = vld [vmem:[#allocation2 + $0x30] sm:$0xff]
    %v153 = vld [vmem:[#allocation2 + $0x38] sm:$0xff]
    %154 = vmatprep.subr.mxu0 0.0
    %155 = vmatpush1.xpose.msra.mxu0 %v146
    %156 = vmatprep.subr.mxu0 0.0
    %157 = vmatpush1.xpose.msra.mxu0 %v147
    %158 = vmatprep.subr.mxu0 0.0
    %159 = vmatpush1.xpose.msra.mxu0 %v148
    %160 = vmatprep.subr.mxu0 0.0
    %161 = vmatpush1.xpose.msra.mxu0 %v149
    %162 = vmatprep.subr.mxu0 0.0
    %163 = vmatpush1.xpose.msra.mxu0 %v150
    %164 = vmatprep.subr.mxu0 0.0
    %165 = vmatpush1.xpose.msra.mxu0 %v151
    %166 = vmatprep.subr.mxu0 0.0
    %167 = vmatpush1.xpose.msra.mxu0 %v152
    %168 = vmatprep.subr.mxu0 0.0
    %169 = vmatpush1.xpose.msra.mxu0 %v153
    %170 = vmatprep.subr.mxu0 0.0
    %171 = vmatpush1.xpose.msra.mxu0 0.0
    %172 = vmatprep.subr.mxu0 0.0
    %173 = vmatpush1.xpose.msra.mxu0 0.0
    %174 = vmatprep.subr.mxu0 0.0
    %175 = vmatpush1.xpose.msra.mxu0 0.0
    %176 = vmatprep.subr.mxu0 0.0
    %177 = vmatpush1.xpose.msra.mxu0 0.0
    %178 = vmatprep.subr.mxu0 0.0
    %179 = vmatpush1.xpose.msra.mxu0 0.0
    %180 = vmatprep.subr.mxu0 0.0
    %181 = vmatpush1.xpose.msra.mxu0 0.0
    %182 = vmatprep.subr.mxu0 0.0
    %183 = vmatpush1.xpose.msra.mxu0 0.0
    %184 = vmatprep.subr.mxu0 0.0
    %185 = vmatpush1.xpose.msra.mxu0 0.0
    %186 = vmatprep.subr.mxu0 0.0
    %187 = vmatpush1.xpose.msra.mxu0 0.0
    %188 = vmatprep.subr.mxu0 0.0
    %189 = vmatpush1.xpose.msra.mxu0 0.0
    %190 = vmatprep.subr.mxu0 0.0
    %191 = vmatpush1.xpose.msra.mxu0 0.0
    %192 = vmatprep.subr.mxu0 0.0
    %193 = vmatpush1.xpose.msra.mxu0 0.0
    %194 = vmatprep.subr.mxu0 0.0
    %195 = vmatpush1.xpose.msra.mxu0 0.0
    %196 = vmatprep.subr.mxu0 0.0
    %197 = vmatpush1.xpose.msra.mxu0 0.0
    %198 = vmatprep.subr.mxu0 0.0
    %199 = vmatpush1.xpose.msra.mxu0 0.0
    %200 = vmatprep.subr.mxu0 0.0
    %201 = vmatpush1.xpose.msra.mxu0 0.0
    %202 = vmatprep.subr.mxu0 0.0
    %203 = vmatpush1.xpose.msra.mxu0 0.0
    %204 = vmatprep.subr.mxu0 0.0
    %205 = vmatpush1.xpose.msra.mxu0 0.0
    %206 = vmatprep.subr.mxu0 0.0
    %207 = vmatpush1.xpose.msra.mxu0 0.0
    %208 = vmatprep.subr.mxu0 0.0
    %209 = vmatpush1.xpose.msra.mxu0 0.0
    %210 = vmatprep.subr.mxu0 0.0
    %211 = vmatpush1.xpose.msra.mxu0 0.0
    %212 = vmatprep.subr.mxu0 0.0
    %213 = vmatpush1.xpose.msra.mxu0 0.0
    %214 = vmatprep.subr.mxu0 0.0
    %215 = vmatpush1.xpose.msra.mxu0 0.0
    %216 = vmatprep.subr.mxu0 0.0
    %217 = vmatpush1.xpose.msra.mxu0 0.0
    %218 = vmatprep.mubr.f32.mxu0 0.0
    %219 = vmatmul.mubr.f32.gmra.mrb[0].mxu0 %v138
    %v220 = vpop.f32.mrb[0].mxu0
    %v221 = vadd.f32 0.0, %v220
    %v222 = vpop.f32.mrb[0].mxu0
    %223 = vmatprep.mubr.f32.mxu0 0.0
    %224 = vmatmul.mubr.f32.gmra.mrb[0].mxu0 %v143
    %v225 = vpop.f32.mrb[0].mxu0
    %v226 = vadd.f32 0.0, %v225
    %v227 = vpop.f32.mrb[0].mxu0
    %228 = vdwg.mxu0
    %v229 = vld [vmem:[%s1] sm:$0xff]
    %v230 = vld [vmem:[%s1 + $0x8] sm:$0xff]
    %231 = vset.pattern.permute.xlu0 0
    %232 = vperm.xlu0 %231, %v229
    %v233 = vpop.permute.xlu0 %232
    %234 = vset.pattern.permute.xlu0 0
    %235 = vperm.xlu0 %234, %v230
    %v236 = vpop.permute.xlu0 %235
    %vm237 = vcmp.eq.s32.totalorder %v233, %v41
    %vm238 = vcmp.eq.s32.totalorder %v236, %v41
    %v239 = vsel %vm237, %v221, 0.0
    %v240 = vsel %vm238, %v226, 0.0
    %v241 = vsel %vm64, %v239, 0.0
    %242 = vadd.xlane.f32.xlu0 %v241
    %v243 = vpop.xlane.xlu0 %242
    %v244 = vsel %vm64, %v240, 0.0
    %245 = vadd.xlane.f32.xlu0 %v244
    %v246 = vpop.xlane.xlu0 %245
    %v247 = vmin.f32 %v243, 0.0
    %v248 = vmin.f32 %v246, 0.0
    %v249 = vand.u32 2147483647, %v243
    %v250 = vand.u32 2147483647, %v246
    %v251 = vsub.f32 0.0, %v249
    %v252 = vsub.f32 0.0, %v250
    %v253 = vmul.f32 %v251, 1.442695
    %v254 = vpow.pop %v253
    %v255 = vmul.f32 %v252, 1.442695
    %v256 = vpow.pop %v255
    %v257 = vadd.f32 %v254, 1.0
    %v258 = vadd.f32 %v256, 1.0
    %v259 = vlog2.pop %v257
    %v260 = vmul.f32 %v259, 0.6931472
    %v261 = vlog2.pop %v258
    %v262 = vmul.f32 %v261, 0.6931472
    %v263 = vsub.f32 %v247, %v260
    %v264 = vsub.f32 %v248, %v262
    %v265 = vld [vmem:[%s2] sm:$0xff]
    %v266 = vld [vmem:[%s2 + $0x8] sm:$0xff]
    %267 = vset.pattern.permute.xlu0 0
    %268 = vperm.xlu0 %267, %v265
    %v269 = vpop.permute.xlu0 %268
    %270 = vset.pattern.permute.xlu0 0
    %271 = vperm.xlu0 %270, %v266
    %v272 = vpop.permute.xlu0 %271
    %vm273 = vcmp.eq.s32.totalorder %v269, %v41
    %vm274 = vcmp.eq.s32.totalorder %v272, %v41
    %v275 = vsel %vm273, %v221, 0.0
    %v276 = vsel %vm274, %v226, 0.0
    %v277 = vsel %vm64, %v275, 0.0
    %278 = vadd.xlane.f32.xlu0 %v277
    %v279 = vpop.xlane.xlu0 %278
    %v280 = vsel %vm64, %v276, 0.0
    %281 = vadd.xlane.f32.xlu0 %v280
    %v282 = vpop.xlane.xlu0 %281
    %v283 = vsub.f32 0.0, %v279
    %v284 = vsub.f32 0.0, %v282
    %v285 = vmin.f32 %v283, 0.0
    %v286 = vmin.f32 %v284, 0.0
    %v287 = vand.u32 2147483647, %v283
    %v288 = vand.u32 2147483647, %v284
    %v289 = vsub.f32 0.0, %v287
    %v290 = vsub.f32 0.0, %v288
    %v291 = vmul.f32 %v289, 1.442695
    %v292 = vpow.pop %v291
    %v293 = vmul.f32 %v290, 1.442695
    %v294 = vpow.pop %v293
    %v295 = vadd.f32 %v292, 1.0
    %v296 = vadd.f32 %v294, 1.0
    %v297 = vlog2.pop %v295
    %v298 = vmul.f32 %v297, 0.6931472
    %v299 = vlog2.pop %v296
    %v300 = vmul.f32 %v299, 0.6931472
    %v301 = vsub.f32 %v285, %v298
    %v302 = vsub.f32 %v286, %v300
    %v303 = vadd.f32 %v263, %v301
    %v304 = vadd.f32 %v264, %v302
    %v305 = vld [vmem:[%s2 + $0x10] sm:$0xff]
    %v306 = vld [vmem:[%s2 + $0x18] sm:$0xff]
    %307 = vset.pattern.permute.xlu0 0
    %308 = vperm.xlu0 %307, %v305
    %v309 = vpop.permute.xlu0 %308
    %310 = vset.pattern.permute.xlu0 0
    %311 = vperm.xlu0 %310, %v306
    %v312 = vpop.permute.xlu0 %311
    %vm313 = vcmp.eq.s32.totalorder %v309, %v41
    %vm314 = vcmp.eq.s32.totalorder %v312, %v41
    %v315 = vsel %vm313, %v221, 0.0
    %v316 = vsel %vm314, %v226, 0.0
    %v317 = vsel %vm64, %v315, 0.0
    %318 = vadd.xlane.f32.xlu0 %v317
    %v319 = vpop.xlane.xlu0 %318
    %v320 = vsel %vm64, %v316, 0.0
    %321 = vadd.xlane.f32.xlu0 %v320
    %v322 = vpop.xlane.xlu0 %321
    %v323 = vsub.f32 0.0, %v319
    %v324 = vsub.f32 0.0, %v322
    %v325 = vmin.f32 %v323, 0.0
    %v326 = vmin.f32 %v324, 0.0
    %v327 = vand.u32 2147483647, %v323
    %v328 = vand.u32 2147483647, %v324
    %v329 = vsub.f32 0.0, %v327
    %v330 = vsub.f32 0.0, %v328
    %v331 = vmul.f32 %v329, 1.442695
    %v332 = vpow.pop %v331
    %v333 = vmul.f32 %v330, 1.442695
    %v334 = vpow.pop %v333
    %v335 = vadd.f32 %v332, 1.0
    %v336 = vadd.f32 %v334, 1.0
    %v337 = vlog2.pop %v335
    %v338 = vmul.f32 %v337, 0.6931472
    %v339 = vlog2.pop %v336
    %v340 = vmul.f32 %v339, 0.6931472
    %v341 = vsub.f32 %v325, %v338
    %v342 = vsub.f32 %v326, %v340
    %v343 = vadd.f32 %v303, %v341
    %v344 = vadd.f32 %v304, %v342
    %v345 = vld [vmem:[%s2 + $0x20] sm:$0xff]
    %v346 = vld [vmem:[%s2 + $0x28] sm:$0xff]
    %347 = vset.pattern.permute.xlu0 0
    %348 = vperm.xlu0 %347, %v345
    %v349 = vpop.permute.xlu0 %348
    %350 = vset.pattern.permute.xlu0 0
    %351 = vperm.xlu0 %350, %v346
    %v352 = vpop.permute.xlu0 %351
    %vm353 = vcmp.eq.s32.totalorder %v349, %v41
    %vm354 = vcmp.eq.s32.totalorder %v352, %v41
    %v355 = vsel %vm353, %v221, 0.0
    %v356 = vsel %vm354, %v226, 0.0
    %v357 = vsel %vm64, %v355, 0.0
    %358 = vadd.xlane.f32.xlu0 %v357
    %v359 = vpop.xlane.xlu0 %358
    %v360 = vsel %vm64, %v356, 0.0
    %361 = vadd.xlane.f32.xlu0 %v360
    %v362 = vpop.xlane.xlu0 %361
    %v363 = vsub.f32 0.0, %v359
    %v364 = vsub.f32 0.0, %v362
    %v365 = vmin.f32 %v363, 0.0
    %v366 = vmin.f32 %v364, 0.0
    %v367 = vand.u32 2147483647, %v363
    %v368 = vand.u32 2147483647, %v364
    %v369 = vsub.f32 0.0, %v367
    %v370 = vsub.f32 0.0, %v368
    %v371 = vmul.f32 %v369, 1.442695
    %v372 = vpow.pop %v371
    %v373 = vmul.f32 %v370, 1.442695
    %v374 = vpow.pop %v373
    %v375 = vadd.f32 %v372, 1.0
    %v376 = vadd.f32 %v374, 1.0
    %v377 = vlog2.pop %v375
    %v378 = vmul.f32 %v377, 0.6931472
    %v379 = vlog2.pop %v376
    %v380 = vmul.f32 %v379, 0.6931472
    %v381 = vsub.f32 %v365, %v378
    %v382 = vsub.f32 %v366, %v380
    %v383 = vadd.f32 %v343, %v381
    %v384 = vadd.f32 %v344, %v382
    %v385 = vld [vmem:[%s2 + $0x30] sm:$0xff]
    %v386 = vld [vmem:[%s2 + $0x38] sm:$0xff]
    %387 = vset.pattern.permute.xlu0 0
    %388 = vperm.xlu0 %387, %v385
    %v389 = vpop.permute.xlu0 %388
    %390 = vset.pattern.permute.xlu0 0
    %391 = vperm.xlu0 %390, %v386
    %v392 = vpop.permute.xlu0 %391
    %vm393 = vcmp.eq.s32.totalorder %v389, %v41
    %vm394 = vcmp.eq.s32.totalorder %v392, %v41
    %v395 = vsel %vm393, %v221, 0.0
    %v396 = vsel %vm394, %v226, 0.0
    %v397 = vsel %vm64, %v395, 0.0
    %398 = vadd.xlane.f32.xlu0 %v397
    %v399 = vpop.xlane.xlu0 %398
    %v400 = vsel %vm64, %v396, 0.0
    %401 = vadd.xlane.f32.xlu0 %v400
    %v402 = vpop.xlane.xlu0 %401
    %v403 = vsub.f32 0.0, %v399
    %v404 = vsub.f32 0.0, %v402
    %v405 = vmin.f32 %v403, 0.0
    %v406 = vmin.f32 %v404, 0.0
    %v407 = vand.u32 2147483647, %v403
    %v408 = vand.u32 2147483647, %v404
    %v409 = vsub.f32 0.0, %v407
    %v410 = vsub.f32 0.0, %v408
    %v411 = vmul.f32 %v409, 1.442695
    %v412 = vpow.pop %v411
    %v413 = vmul.f32 %v410, 1.442695
    %v414 = vpow.pop %v413
    %v415 = vadd.f32 %v412, 1.0
    %v416 = vadd.f32 %v414, 1.0
    %v417 = vlog2.pop %v415
    %v418 = vmul.f32 %v417, 0.6931472
    %v419 = vlog2.pop %v416
    %v420 = vmul.f32 %v419, 0.6931472
    %v421 = vsub.f32 %v405, %v418
    %v422 = vsub.f32 %v406, %v420
    %v423 = vadd.f32 %v383, %v421
    %v424 = vadd.f32 %v384, %v422
    %s425 = smul.u32 0, 16
    %v426 = vlaneseq
    %v427 = vshrl.u32 %v426, 7
    %v428 = vadd.s32 %v427, 8
    %v429 = vstv %s425
    %v430 = vadd.s32 %v429, %v427
    %v431 = vadd.s32 %v429, %v428
    %vm432 = vcmp.lt.s32.totalorder %v430, 10
    %vm433 = vcmp.lt.s32.totalorder %v431, 10
    %v434 = vsel %vm432, %v423, 0.0
    %v435 = vsel %vm433, %v424, 0.0
    %v436 = vld [vmem:[#allocation5] sm:$0x1]
    %v437 = vadd.f32 %v434, %v435
    %v438 = vrot.slane %v437, 4
    %v439 = vadd.f32 %v437, %v438
    %v440 = vrot.slane %v439, 2
    %v441 = vadd.f32 %v439, %v440
    %v442 = vrot.slane %v441, 1
    %v443 = vadd.f32 %v441, %v442
    %v444 = vadd.f32 %v436, %v443
    %vm445 = vcmask 0
    %446 = vst.msk [vmem:[#allocation5] sm:$0x1] %vm445, %v444
    // Predicated region
    $region30: #{tpu_custom_call.1} parent=1 // pred_check
      _
    $region31: #{tpu_custom_call.1} parent=1 // pred_check_branch
      %448 = sbr.rel (0) target = $region33
    $region32: #{tpu_custom_call.1} parent=1 // pred_region
      %s450 = ssub.s32 128, 128
      %451 = vsyncadd [#allocation4], %s450
      %s453 = sshll.u32 [#allocation5], 4
      %s454 = int_to_ptr.vmem [resolvable:$true] %s453
      %456 = dma.vmem_to_hbm [thread:$0]  %s454, 128, %s5, [#allocation4]
    $region33: #{tpu_custom_call.1} parent=1 // pred_fallthru
      _
    // Predicated region
    $region34: #{tpu_custom_call.1} parent=1 // pred_check
      _
    $region35: #{tpu_custom_call.1} parent=1 // pred_check_branch
      %458 = sbr.rel (0) target = $region37
    $region36: #{tpu_custom_call.1} parent=1 // pred_region
      %459 = dma.done [#allocation4], 128
    $region37: #{tpu_custom_call.1} parent=1 // pred_fallthru
      _
    %460 = vsyncpa [#allocation3], 1
    %461 = vsyncpa [#allocation4], 1

</llo_original>
